<compile_context>
chip_gen: v7x
topology: tpu7x:2x2x1
jax: 0.10.0
libtpu: 0.0.40
codegen_flags: <defaults>
</compile_context>

<pallas_src>
import jax
import jax.numpy as jnp
from jax.experimental import pallas as pl
from jax.experimental.pallas import tpu as pltpu


def _vlab_kernel(x_ref, wa_ref, ba_ref, wm_ref, bm_ref,
                 w1_ref, b1_ref, w2_ref, b2_ref, o_ref):
    """One (C, T) tile: fused channel-mix + gate + scale.

    x_ref/o_ref : (C, T) VMEM tiles, channels on sublanes, pixels on lanes.
    wa/wm       : (C, C) folded (linear @ conv) weights per branch (VMEM).
    ba/bm       : (C, 1) branch biases (VMEM, broadcast over lanes).
    w1/b1/w2/b2 : bottleneck MLP scalars (SMEM).
    """
    x = x_ref[...]                                               # (C, T)

    # avg branch: relu((Wl@Wc) @ x + b) -> mean over channels
    za = jnp.dot(wa_ref[...], x, preferred_element_type=jnp.float32)
    za = jnp.maximum(za + ba_ref[...], 0.0)
    s_avg = jnp.mean(za, axis=0, keepdims=True)                  # (1, T)

    # max branch: relu((Wl@Wc) @ x + b) -> max over channels
    zm = jnp.dot(wm_ref[...], x, preferred_element_type=jnp.float32)
    zm = jnp.maximum(zm + bm_ref[...], 0.0)
    s_max = jnp.max(zm, axis=0, keepdims=True)                   # (1, T)

    s = s_avg + s_max                                            # (1, T)

    # bottleneck gate: Linear(1,4) -> ReLU -> Linear(4,1), unrolled VPU FMAs
    # on the (1, T) gate vector; weights are SMEM scalars (never touch MXU).
    g = jnp.zeros_like(s) + b2_ref[0]
    for k in range(w1_ref.shape[0]):
        g = g + w2_ref[k] * jnp.maximum(w1_ref[k] * s + b1_ref[k], 0.0)

    # Apply the gate in the input dtype: no extra full-tile f32 temporary.
    o_ref[...] = (x * g.astype(x.dtype)).astype(o_ref.dtype)


def _pick_tile_hw(HW, B, C, itemsize, vmem_cap, max_tile_hw):
    """Lane-aligned pixel-tile size bounded by a VMEM budget."""
    # Per pixel column: double-buffered x + out tiles, plus the two (C, T)
    # f32 matmul intermediates (za, zm) that live inside the kernel body.
    per_hw = C * (4 * itemsize + 2 * 4)
    budget = max(vmem_cap // 3, 4 << 20)
    t = max(budget // per_hw, 128)
    t = min(t, HW, max_tile_hw)
    if t < HW:
        t = max(128, (t // 128) * 128)          # lane-aligned interior tiles
    # v7x has 2 TensorCores sharing the parallel grid: with a single batch and
    # a single full-HW tile the second core would idle, so force a split.
    if B == 1 and t >= HW and HW >= 256:
        t = ((HW + 1) // 2 + 127) // 128 * 128
    return int(t)


def vl_align_block(x, params, *, max_tile_hw=8192):
    """x: (B, C, H, W).  Returns (B, C, H, W)."""
    B, C, H, W = x.shape
    HW = H * W
    x3 = x.reshape(B, C, HW)   # NCHW is already channels-leading: free reshape

    # Fold 1x1 conv (no bias) + Linear per branch (no nonlinearity between):
    #   z = Wl @ (Wc @ v) + b  ==  (Wl @ Wc) @ v + b
    w_avg = params["linear_avg_w"] @ params["conv_avg_w"]        # (C, C)
    w_max = params["linear_max_w"] @ params["conv_max_w"]        # (C, C)
    b_avg = params["linear_avg_b"].reshape(C, 1)
    b_max = params["linear_max_b"].reshape(C, 1)
    w1 = params["bneck_w1"].reshape(-1)                          # (4,)
    b1 = params["bneck_b1"].reshape(-1)                          # (4,)
    w2 = params["bneck_w2"].reshape(-1)                          # (4,)
    b2 = params["bneck_b2"].reshape(-1)                          # (1,)

    itemsize = x.dtype.itemsize
    try:
        vmem_cap = int(pltpu.get_tpu_info().vmem_capacity_bytes)
    except Exception:
        vmem_cap = 64 * 1024 * 1024   # conservative v7x floor

    tile_hw = _pick_tile_hw(HW, B, C, itemsize, vmem_cap, max_tile_hw)
    n_hw = pl.cdiv(HW, tile_hw)

    # VMEM budget: pipeline buffers + in-kernel f32 intermediates + weights
    # (double-buffered by the pipeline even though grid-invariant) + slack.
    tile_bytes = C * tile_hw * (4 * itemsize + 2 * 4)
    w_bytes = 2 * 2 * (C * C + C) * 4
    vmem_limit = tile_bytes + w_bytes + (4 << 20)
    vmem_limit = max(vmem_limit, 32 << 20)
    vmem_limit = min(vmem_limit, vmem_cap - (8 << 20))
    vmem_limit = max(vmem_limit, 16 << 20)

    xy_spec = pl.BlockSpec((None, C, tile_hw), lambda b, j: (b, 0, j))
    const2d = lambda b, j: (0, 0)
    smem = pl.BlockSpec(memory_space=pltpu.MemorySpace.SMEM)
    # Grid-invariant weight blocks (constant index_map -> fetched once).
    # TODO(synk): for very large C on v7x, single-buffer these via
    # pipeline_mode=pl.Buffered(1) and cast to bf16 to fit 64 MiB VMEM.
    w_specs = [pl.BlockSpec((C, C), const2d), pl.BlockSpec((C, 1), const2d),
               pl.BlockSpec((C, C), const2d), pl.BlockSpec((C, 1), const2d)]

    cost = pl.CostEstimate(
        flops=int(B * HW * (4 * C * C + 2 * C + 16)),
        transcendentals=0,
        bytes_accessed=int(2 * B * C * HW * itemsize + 2 * (C * C + C) * 4),
    )

    y3 = pl.pallas_call(
        _vlab_kernel,
        out_shape=jax.ShapeDtypeStruct((B, C, HW), x.dtype),
        grid_spec=pltpu.PrefetchScalarGridSpec(
            num_scalar_prefetch=0,
            grid=(B, n_hw),
            in_specs=[xy_spec, *w_specs, smem, smem, smem, smem],
            out_specs=pl.BlockSpec((None, C, tile_hw), lambda b, j: (b, 0, j)),
        ),
        compiler_params=pltpu.CompilerParams(
            dimension_semantics=("parallel", "parallel"),
            vmem_limit_bytes=int(vmem_limit)),
        cost_estimate=cost,
    )(x3, w_avg, b_avg, w_max, b_max, w1, b1, w2, b2)

    return y3.reshape(B, C, H, W)


def init_params(key, C):
    ks = jax.random.split(key, 10)
    mid = 4  # 2 * middle_layer_size_ratio
    scale = 0.1
    return {
        "conv_avg_w":   scale * jax.random.normal(ks[0], (C, C), jnp.float32),
        "linear_avg_w": scale * jax.random.normal(ks[1], (C, C), jnp.float32),
        "linear_avg_b": scale * jax.random.normal(ks[2], (C,), jnp.float32),
        "conv_max_w":   scale * jax.random.normal(ks[3], (C, C), jnp.float32),
        "linear_max_w": scale * jax.random.normal(ks[4], (C, C), jnp.float32),
        "linear_max_b": scale * jax.random.normal(ks[5], (C,), jnp.float32),
        "bneck_w1":     scale * jax.random.normal(ks[6], (mid, 1), jnp.float32),
        "bneck_b1":     scale * jax.random.normal(ks[7], (mid,), jnp.float32),
        "bneck_w2":     scale * jax.random.normal(ks[8], (1, mid), jnp.float32),
        "bneck_b2":     scale * jax.random.normal(ks[9], (1,), jnp.float32),
        # TODO(synk): conv_sig + Sigmoid exist in __init__ but are unused in
        # the PyTorch forward; intentionally omitted.
    }


def _reference(x, p):
    """Pure-JAX reference mirroring the PyTorch forward exactly (unfolded)."""
    xf = jnp.transpose(x, (0, 2, 3, 1))                          # (B,H,W,C)
    a = xf @ p["conv_avg_w"].T
    a = a @ p["linear_avg_w"].T + p["linear_avg_b"]
    a = jnp.maximum(a, 0.0)
    s_avg = jnp.mean(a, axis=-1, keepdims=True)
    m = xf @ p["conv_max_w"].T
    m = m @ p["linear_max_w"].T + p["linear_max_b"]
    m = jnp.maximum(m, 0.0)
    s_max = jnp.max(m, axis=-1, keepdims=True)
    s = s_avg + s_max
    h = jnp.maximum(s @ p["bneck_w1"].T + p["bneck_b1"], 0.0)
    g = h @ p["bneck_w2"].T + p["bneck_b2"]
    y = xf * g
    return jnp.transpose(y, (0, 3, 1, 2))


if __name__ == "__main__":
    key = jax.random.PRNGKey(0)
    k_x, k_p, k_x2, k_p2 = jax.random.split(key, 4)

    # Case 1: tiny C, lane-exact HW (16*16 = 256), B = 2.
    B, C, H, W = 2, 4, 16, 16
    x = jax.random.normal(k_x, (B, C, H, W), jnp.float32)
    params = init_params(k_p, C)
    y = jax.block_until_ready(vl_align_block(x, params))
    y_ref = _reference(x, params)
    assert y.shape == (B, C, H, W)
    assert jnp.allclose(y, y_ref, atol=1e-4, rtol=1e-4), "case1 mismatch"

    # Case 2: B = 1 (forces the >=2-step HW split), C multiple of 8,
    # ragged HW (300 = 256 + 44 edge block).
    B2, C2, H2, W2 = 1, 16, 15, 20
    x2 = jax.random.normal(k_x2, (B2, C2, H2, W2), jnp.float32)
    params2 = init_params(k_p2, C2)
    y2 = jax.block_until_ready(vl_align_block(x2, params2))
    y2_ref = _reference(x2, params2)
    assert jnp.allclose(y2, y2_ref, atol=1e-4, rtol=1e-4), "case2 mismatch"

    print("KERNEL_OK")
</pallas_src>

<mosaic_0001>
module attributes {stable_mosaic.version = 11 : i64} {
  func.func @_vlab_kernel(%arg0: i32, %arg1: i32, %arg2: memref<1x4x256xf32, #tpu.memory_space<vmem>>, %arg3: memref<4x4xf32, #tpu.memory_space<vmem>>, %arg4: memref<4x1xf32, #tpu.memory_space<vmem>>, %arg5: memref<4x4xf32, #tpu.memory_space<vmem>>, %arg6: memref<4x1xf32, #tpu.memory_space<vmem>>, %arg7: memref<4xf32, #tpu.memory_space<smem>>, %arg8: memref<4xf32, #tpu.memory_space<smem>>, %arg9: memref<4xf32, #tpu.memory_space<smem>>, %arg10: memref<1xf32, #tpu.memory_space<smem>>, %arg11: memref<1x4x256xf32, #tpu.memory_space<vmem>>) attributes {dimension_semantics = [#tpu.dimension_semantics<parallel>, #tpu.dimension_semantics<parallel>], iteration_bounds = array<i64: 2, 1>, scalar_prefetch = 0 : i64, scratch_operands = 0 : i64, tpu.core_type = #tpu.core_type<tc>, window_params = [{transform_indices = @transform_0, window_bounds = array<i64: 1, 4, 256>}, {pipeline_mode = #tpu.pipeline_mode<synchronous>, transform_indices = @transform_1, window_bounds = array<i64: 4, 4>}, {pipeline_mode = #tpu.pipeline_mode<synchronous>, transform_indices = @transform_2, window_bounds = array<i64: 4, 1>}, {pipeline_mode = #tpu.pipeline_mode<synchronous>, transform_indices = @transform_3, window_bounds = array<i64: 4, 4>}, {pipeline_mode = #tpu.pipeline_mode<synchronous>, transform_indices = @transform_4, window_bounds = array<i64: 4, 1>}, {transform_indices = @transform_5, window_bounds = array<i64: 4>}, {transform_indices = @transform_6, window_bounds = array<i64: 4>}, {transform_indices = @transform_7, window_bounds = array<i64: 4>}, {transform_indices = @transform_8, window_bounds = array<i64: 1>}, {transform_indices = @transform_9, window_bounds = array<i64: 1, 4, 256>}]} {
    %c0 = arith.constant 0 : index
    %c0_0 = arith.constant 0 : index
    %c0_1 = arith.constant 0 : index
    %0 = vector.load %arg2[%c0, %c0_0, %c0_1] : memref<1x4x256xf32, #tpu.memory_space<vmem>>, vector<1x4x256xf32>
    %1 = vector.shape_cast %0 : vector<1x4x256xf32> to vector<4x256xf32>
    %c0_2 = arith.constant 0 : index
    %c0_3 = arith.constant 0 : index
    %2 = vector.load %arg3[%c0_2, %c0_3] : memref<4x4xf32, #tpu.memory_space<vmem>>, vector<4x4xf32>
    %cst = arith.constant dense<0.000000e+00> : vector<4x256xf32>
    %3 = tpu.matmul %2, %1, %cst {dimension_numbers = #tpu.dot_dimension_numbers<[1], [0], [0], [1], [0, 0, 1, 1], [], []>} : vector<4x4xf32>, vector<4x256xf32>, vector<4x256xf32> -> vector<4x256xf32>
    %c0_4 = arith.constant 0 : index
    %c0_5 = arith.constant 0 : index
    %4 = vector.load %arg4[%c0_4, %c0_5] : memref<4x1xf32, #tpu.memory_space<vmem>>, vector<4x1xf32>
    %5 = vector.broadcast %4 : vector<4x1xf32> to vector<4x256xf32>
    %6 = arith.addf %3, %5 : vector<4x256xf32>
    %cst_6 = arith.constant 0.000000e+00 : f32
    %7 = vector.broadcast %cst_6 : f32 to vector<4x256xf32>
    %8 = arith.maximumf %6, %7 : vector<4x256xf32>
    %cst_7 = arith.constant dense<0.000000e+00> : vector<256xf32>
    %9 = vector.multi_reduction <add>, %8, %cst_7 [0] : vector<4x256xf32> to vector<256xf32>
    %10 = vector.shape_cast %9 : vector<256xf32> to vector<1x256xf32>
    %cst_8 = arith.constant 4.000000e+00 : f32
    %11 = vector.broadcast %cst_8 : f32 to vector<1x256xf32>
    %12 = arith.divf %10, %11 : vector<1x256xf32>
    %c0_9 = arith.constant 0 : index
    %c0_10 = arith.constant 0 : index
    %13 = vector.load %arg5[%c0_9, %c0_10] : memref<4x4xf32, #tpu.memory_space<vmem>>, vector<4x4xf32>
    %cst_11 = arith.constant dense<0.000000e+00> : vector<4x256xf32>
    %14 = tpu.matmul %13, %1, %cst_11 {dimension_numbers = #tpu.dot_dimension_numbers<[1], [0], [0], [1], [0, 0, 1, 1], [], []>} : vector<4x4xf32>, vector<4x256xf32>, vector<4x256xf32> -> vector<4x256xf32>
    %c0_12 = arith.constant 0 : index
    %c0_13 = arith.constant 0 : index
    %15 = vector.load %arg6[%c0_12, %c0_13] : memref<4x1xf32, #tpu.memory_space<vmem>>, vector<4x1xf32>
    %16 = vector.broadcast %15 : vector<4x1xf32> to vector<4x256xf32>
    %17 = arith.addf %14, %16 : vector<4x256xf32>
    %cst_14 = arith.constant 0.000000e+00 : f32
    %18 = vector.broadcast %cst_14 : f32 to vector<4x256xf32>
    %19 = arith.maximumf %17, %18 : vector<4x256xf32>
    %cst_15 = arith.constant dense<0xFF800000> : vector<256xf32>
    %20 = vector.multi_reduction <maximumf>, %19, %cst_15 [0] : vector<4x256xf32> to vector<256xf32>
    %21 = vector.shape_cast %20 : vector<256xf32> to vector<1x256xf32>
    %22 = arith.addf %12, %21 : vector<1x256xf32>
    %cst_16 = arith.constant 0.000000e+00 : f32
    %23 = vector.broadcast %cst_16 : f32 to vector<1x256xf32>
    %c0_17 = arith.constant 0 : index
    %24 = memref.load %arg10[%c0_17] : memref<1xf32, #tpu.memory_space<smem>>
    %25 = vector.broadcast %24 : f32 to vector<1x256xf32>
    %26 = arith.addf %23, %25 : vector<1x256xf32>
    %c0_18 = arith.constant 0 : index
    %27 = memref.load %arg9[%c0_18] : memref<4xf32, #tpu.memory_space<smem>>
    %c0_19 = arith.constant 0 : index
    %28 = memref.load %arg7[%c0_19] : memref<4xf32, #tpu.memory_space<smem>>
    %29 = vector.broadcast %28 : f32 to vector<1x256xf32>
    %30 = arith.mulf %29, %22 : vector<1x256xf32>
    %c0_20 = arith.constant 0 : index
    %31 = memref.load %arg8[%c0_20] : memref<4xf32, #tpu.memory_space<smem>>
    %32 = vector.broadcast %31 : f32 to vector<1x256xf32>
    %33 = arith.addf %30, %32 : vector<1x256xf32>
    %cst_21 = arith.constant 0.000000e+00 : f32
    %34 = vector.broadcast %cst_21 : f32 to vector<1x256xf32>
    %35 = arith.maximumf %33, %34 : vector<1x256xf32>
    %36 = vector.broadcast %27 : f32 to vector<1x256xf32>
    %37 = arith.mulf %36, %35 : vector<1x256xf32>
    %38 = arith.addf %26, %37 : vector<1x256xf32>
    %c1 = arith.constant 1 : index
    %39 = memref.load %arg9[%c1] : memref<4xf32, #tpu.memory_space<smem>>
    %c1_22 = arith.constant 1 : index
    %40 = memref.load %arg7[%c1_22] : memref<4xf32, #tpu.memory_space<smem>>
    %41 = vector.broadcast %40 : f32 to vector<1x256xf32>
    %42 = arith.mulf %41, %22 : vector<1x256xf32>
    %c1_23 = arith.constant 1 : index
    %43 = memref.load %arg8[%c1_23] : memref<4xf32, #tpu.memory_space<smem>>
    %44 = vector.broadcast %43 : f32 to vector<1x256xf32>
    %45 = arith.addf %42, %44 : vector<1x256xf32>
    %cst_24 = arith.constant 0.000000e+00 : f32
    %46 = vector.broadcast %cst_24 : f32 to vector<1x256xf32>
    %47 = arith.maximumf %45, %46 : vector<1x256xf32>
    %48 = vector.broadcast %39 : f32 to vector<1x256xf32>
    %49 = arith.mulf %48, %47 : vector<1x256xf32>
    %50 = arith.addf %38, %49 : vector<1x256xf32>
    %c2 = arith.constant 2 : index
    %51 = memref.load %arg9[%c2] : memref<4xf32, #tpu.memory_space<smem>>
    %c2_25 = arith.constant 2 : index
    %52 = memref.load %arg7[%c2_25] : memref<4xf32, #tpu.memory_space<smem>>
    %53 = vector.broadcast %52 : f32 to vector<1x256xf32>
    %54 = arith.mulf %53, %22 : vector<1x256xf32>
    %c2_26 = arith.constant 2 : index
    %55 = memref.load %arg8[%c2_26] : memref<4xf32, #tpu.memory_space<smem>>
    %56 = vector.broadcast %55 : f32 to vector<1x256xf32>
    %57 = arith.addf %54, %56 : vector<1x256xf32>
    %cst_27 = arith.constant 0.000000e+00 : f32
    %58 = vector.broadcast %cst_27 : f32 to vector<1x256xf32>
    %59 = arith.maximumf %57, %58 : vector<1x256xf32>
    %60 = vector.broadcast %51 : f32 to vector<1x256xf32>
    %61 = arith.mulf %60, %59 : vector<1x256xf32>
    %62 = arith.addf %50, %61 : vector<1x256xf32>
    %c3 = arith.constant 3 : index
    %63 = memref.load %arg9[%c3] : memref<4xf32, #tpu.memory_space<smem>>
    %c3_28 = arith.constant 3 : index
    %64 = memref.load %arg7[%c3_28] : memref<4xf32, #tpu.memory_space<smem>>
    %65 = vector.broadcast %64 : f32 to vector<1x256xf32>
    %66 = arith.mulf %65, %22 : vector<1x256xf32>
    %c3_29 = arith.constant 3 : index
    %67 = memref.load %arg8[%c3_29] : memref<4xf32, #tpu.memory_space<smem>>
    %68 = vector.broadcast %67 : f32 to vector<1x256xf32>
    %69 = arith.addf %66, %68 : vector<1x256xf32>
    %cst_30 = arith.constant 0.000000e+00 : f32
    %70 = vector.broadcast %cst_30 : f32 to vector<1x256xf32>
    %71 = arith.maximumf %69, %70 : vector<1x256xf32>
    %72 = vector.broadcast %63 : f32 to vector<1x256xf32>
    %73 = arith.mulf %72, %71 : vector<1x256xf32>
    %74 = arith.addf %62, %73 : vector<1x256xf32>
    %75 = vector.broadcast %74 : vector<1x256xf32> to vector<4x256xf32>
    %76 = arith.mulf %1, %75 : vector<4x256xf32>
    %c0_31 = arith.constant 0 : index
    %c0_32 = arith.constant 0 : index
    %c0_33 = arith.constant 0 : index
    %77 = vector.load %arg11[%c0_31, %c0_32, %c0_33] : memref<1x4x256xf32, #tpu.memory_space<vmem>>, vector<1x4x256xf32>
    %78 = vector.shape_cast %77 : vector<1x4x256xf32> to vector<4x256xf32>
    %79 = vector.shape_cast %76 : vector<4x256xf32> to vector<1x4x256xf32>
    tpu.vector_store %arg11[%c0_31, %c0_32, %c0_33], %79 {strides = array<i32>} : memref<1x4x256xf32, #tpu.memory_space<vmem>>, vector<1x4x256xf32>,
    return
  }
  func.func @transform_0(%arg0: i32, %arg1: i32) -> (i32, i32, i32) {
    %c0_i32 = arith.constant 0 : i32
    %c0_i32_0 = arith.constant 0 : i32
    return %arg0, %c0_i32, %arg1 : i32, i32, i32
  }
  func.func @transform_1(%arg0: i32, %arg1: i32) -> (i32, i32) {
    %c0_i32 = arith.constant 0 : i32
    %c0_i32_0 = arith.constant 0 : i32
    %c0_i32_1 = arith.constant 0 : i32
    return %c0_i32, %c0_i32_0 : i32, i32
  }
  func.func @transform_2(%arg0: i32, %arg1: i32) -> (i32, i32) {
    %c0_i32 = arith.constant 0 : i32
    %c0_i32_0 = arith.constant 0 : i32
    %c0_i32_1 = arith.constant 0 : i32
    return %c0_i32, %c0_i32_0 : i32, i32
  }
  func.func @transform_3(%arg0: i32, %arg1: i32) -> (i32, i32) {
    %c0_i32 = arith.constant 0 : i32
    %c0_i32_0 = arith.constant 0 : i32
    %c0_i32_1 = arith.constant 0 : i32
    return %c0_i32, %c0_i32_0 : i32, i32
  }
  func.func @transform_4(%arg0: i32, %arg1: i32) -> (i32, i32) {
    %c0_i32 = arith.constant 0 : i32
    %c0_i32_0 = arith.constant 0 : i32
    %c0_i32_1 = arith.constant 0 : i32
    return %c0_i32, %c0_i32_0 : i32, i32
  }
  func.func @transform_5(%arg0: i32, %arg1: i32) -> i32 {
    %c0_i32 = arith.constant 0 : i32
    %c0_i32_0 = arith.constant 0 : i32
    return %c0_i32 : i32
  }
  func.func @transform_6(%arg0: i32, %arg1: i32) -> i32 {
    %c0_i32 = arith.constant 0 : i32
    %c0_i32_0 = arith.constant 0 : i32
    return %c0_i32 : i32
  }
  func.func @transform_7(%arg0: i32, %arg1: i32) -> i32 {
    %c0_i32 = arith.constant 0 : i32
    %c0_i32_0 = arith.constant 0 : i32
    return %c0_i32 : i32
  }
  func.func @transform_8(%arg0: i32, %arg1: i32) -> i32 {
    %c0_i32 = arith.constant 0 : i32
    %c0_i32_0 = arith.constant 0 : i32
    return %c0_i32 : i32
  }
  func.func @transform_9(%arg0: i32, %arg1: i32) -> (i32, i32, i32) {
    %c0_i32 = arith.constant 0 : i32
    %c0_i32_0 = arith.constant 0 : i32
    return %arg0, %c0_i32, %arg1 : i32, i32, i32
  }
}

</mosaic_0001>

<llo_original>
// kernel: tpu_custom_call.1
$region0: #{tpu_custom_call.1}
  #allocation0 [shape = 'u32[]', space=smem, size = 0x4, offset = 0x4, fixed_abs, tag = 'smem constant byte address 0x4 - core index']
  #allocation1 [shape = 'u32[144,128]{1,0:T(1,128)}', space=vmem, size = 0x12000, scoped, tag = 'internal scratch']
  #allocation2 [shape = 'f32[1]{0:T(128)S(6)}', space=smem, size = 0x200, scoped, tag = 'scoped memory for tpu_custom_call.1']
  %s0 = inlined_call_operand.hbm [shape: f32[2,4,256], index: 0, kind: input, shape index: {}]
  %s1 = inlined_call_operand.vmem [shape: f32[4,4], index: 1, kind: input, shape index: {}]
  %s2 = inlined_call_operand.vmem [shape: f32[4,1], index: 2, kind: input, shape index: {}]
  %s3 = inlined_call_operand.vmem [shape: f32[4,4], index: 3, kind: input, shape index: {}]
  %s4 = inlined_call_operand.vmem [shape: f32[4,1], index: 4, kind: input, shape index: {}]
  %s5 = inlined_call_operand.vmem [shape: f32[4], index: 5, kind: input, shape index: {}]
  %s6 = inlined_call_operand.vmem [shape: f32[4], index: 6, kind: input, shape index: {}]
  %s7 = inlined_call_operand.vmem [shape: f32[4], index: 7, kind: input, shape index: {}]
  %s8 = inlined_call_operand.<no memory space> [shape: f32[1], index: 8, kind: input, shape index: {}]
  %s9 = inlined_call_operand.hbm [shape: f32[2,4,256], index: 9, kind: output, shape index: {}]
  %s10 = sld [smem:[#allocation0]]
  $region85: #{tpu_custom_call.1} parent=0
    _
  %s12 = ssub.s32 1, %s10
  %s13 = scalar_select 0, %s12, %s10
  %14 = sst [smem:[#allocation2]] %s8
  $region1: #{tpu_custom_call.1} parent=0
    #allocation3 [shape = 'u8[8192]{0}', space=vmem, size = 0x2000, scoped, tag = 'input window, operand 0']
    #allocation4 [shape = 's32[2]{0}', space=sflag, size = 0x8, scoped, tag = 'scoped memory for tpu_custom_call.1']
    #allocation5 [shape = 's32[2]{0}', space=sflag, size = 0x8, scoped, tag = 'scoped memory for tpu_custom_call.1']
    #allocation6 [shape = 's32[2]{0}', space=sflag, size = 0x8, scoped, tag = 'scoped memory for tpu_custom_call.1']
    #allocation7 [shape = 'u8[512]{0}', space=smem, size = 0x200, scoped, tag = 'input window, operand 5, single buffered']
    #allocation8 [shape = 'u8[512]{0}', space=smem, size = 0x200, scoped, tag = 'input window, operand 6, single buffered']
    #allocation9 [shape = 's32[1]{0}', space=sflag, size = 0x4, scoped, tag = 'scoped memory for tpu_custom_call.1']
    #allocation10 [shape = 'u8[512]{0}', space=smem, size = 0x200, scoped, tag = 'input window, operand 7, single buffered']
    #allocation11 [shape = 'u8[8192]{0}', space=vmem, size = 0x2000, scoped, tag = 'output window, operand 0']
    %15 = vsyncpa [#allocation4], 0
    %s16 = scalar_lea.sflag [#allocation4], 1
    %17 = vsyncpa %s16, 0
    %18 = vsyncpa [#allocation6], 0
    %19 = vsyncpa [#allocation9], 0
    %20 = vsyncpa [#allocation5], 0
    %s21 = scalar_lea.sflag [#allocation5], 1
    %22 = vsyncpa %s21, 0
    loop: start=0, step=1, limit=4
    $region2: #{tpu_custom_call.1} parent=1 // loop_pre_header
      _
    $region3: #{tpu_custom_call.1} parent=1 // loop_header
      %s24 = sphi 0, %s28
      %p25 = scmp.ge.s32.totalorder %s24, 4
      %s31 = sphi 0, %s43
      %s32 = sphi 0, %s39
      %s33 = sphi 0, %s31
      %s34 = sphi 0, %s32
      %s35 = sphi 0, %s33
      %s36 = sphi 0, %s34
      %s48 = sphi 0, %s50
      %s51 = sphi 0, %s48
      %s52 = sphi 0, %s51
      %s68 = sphi 0, %s52
      %s72 = sphi 0, %s72
      %s74 = sphi 0, %s72
      %s75 = sphi 0, %s74
      %s89 = sphi 0, %s75
      %s93 = sphi 0, %s93
      %s95 = sphi 0, %s93
      %s96 = sphi 0, %s95
      %s110 = sphi 0, %s96
      %s114 = sphi 0, %s114
      %s116 = sphi 0, %s114
      %s117 = sphi 0, %s116
      %s131 = sphi 0, %s117
      %s135 = sphi 0, %s135
      %s137 = sphi 0, %s135
      %s138 = sphi 0, %s137
      %s152 = sphi 0, %s138
      %s156 = sphi 0, %s156
      %s158 = sphi 0, %s156
      %s159 = sphi 0, %s158
      %s173 = sphi 0, %s159
      %s177 = sphi 0, %s177
      %s179 = sphi 0, %s177
      %s180 = sphi 0, %s179
      %s194 = sphi 0, %s180
      %s198 = sphi 0, %s198
      %s200 = sphi 0, %s198
      %s201 = sphi 0, %s200
      %s215 = sphi 0, %s201
      %s219 = sphi 0, %s219
      %s221 = sphi 0, %s219
      %s222 = sphi 0, %s221
      %s236 = sphi 0, %s222
      %s244 = sphi 0, %s246
      %s247 = sphi 0, %s244
      %s248 = sphi 0, %s247
      %s264 = sphi 0, %s248
    $region4: #{tpu_custom_call.1} parent=1 // loop_header_branch
      %27 = sbr.rel (%p25) target = $region8
    $region5: #{tpu_custom_call.1} parent=1 // loop_body
      %s29 = ssub.s32 %s24, 1
      %s30 = ssub.s32 %s24, 2
      %s37 = sadd.s32 1, %s32
      %p38 = scmp.ge.s32.totalorder %s37, 1
      %s39 = scalar_select %p38, 0, %s37
      %s40 = sadd.s32 1, %s31
      %s41 = scalar_select %p38, %s40, %s31
      %p42 = scmp.ge.s32.totalorder %s41, 2
      %s43 = scalar_select %p42, 0, %s41
      %s44 = ssub.s32 %s31, %s43
      %s45 = ssub.s32 %s32, %s39
      %s46 = sor.u32 %s44, %s45
      %p47 = scmp.eq.s32.totalorder %s46, 0
      %s49 = sadd.s32 %s48, 1
      %s50 = scalar_select %p47, %s48, %s49
      %p53 = pneg %p47
      %p54 = scmp.eq.s32.totalorder %s24, 1
      %p55 = por %p53, %p54
      %p56 = scmp.ne.s32.totalorder %s48, %s51
      %p57 = scmp.eq.s32.totalorder %s24, 0
      %p58 = por %p56, %p57
      %p59 = scmp.ne.s32.totalorder %s48, %s51
      %p60 = scmp.eq.s32.totalorder %s29, 1
      %p61 = por %p59, %p60
      %p62 = scmp.ne.s32.totalorder %s51, %s52
      %p63 = scmp.eq.s32.totalorder %s29, 0
      %p64 = por %p62, %p63
      %p65 = scmp.ne.s32.totalorder %s51, %s52
      %p66 = scmp.eq.s32.totalorder %s30, 1
      %p67 = por %p65, %p66
      %p69 = scmp.ne.s32.totalorder %s52, %s68
      %p70 = scmp.eq.s32.totalorder %s30, 0
      %p71 = por %p69, %p70
      %s73 = sadd.s32 %s72, 1
      %p76 = scmp.eq.s32.totalorder %s24, 1
      %p77 = scmp.ne.s32.totalorder %s72, %s74
      %p78 = scmp.eq.s32.totalorder %s24, 0
      %p79 = por %p77, %p78
      %p80 = scmp.ne.s32.totalorder %s72, %s74
      %p81 = scmp.eq.s32.totalorder %s29, 1
      %p82 = por %p80, %p81
      %p83 = scmp.ne.s32.totalorder %s74, %s75
      %p84 = scmp.eq.s32.totalorder %s29, 0
      %p85 = por %p83, %p84
      %p86 = scmp.ne.s32.totalorder %s74, %s75
      %p87 = scmp.eq.s32.totalorder %s30, 1
      %p88 = por %p86, %p87
      %p90 = scmp.ne.s32.totalorder %s75, %s89
      %p91 = scmp.eq.s32.totalorder %s30, 0
      %p92 = por %p90, %p91
      %s94 = sadd.s32 %s93, 1
      %p97 = scmp.eq.s32.totalorder %s24, 1
      %p98 = scmp.ne.s32.totalorder %s93, %s95
      %p99 = scmp.eq.s32.totalorder %s24, 0
      %p100 = por %p98, %p99
      %p101 = scmp.ne.s32.totalorder %s93, %s95
      %p102 = scmp.eq.s32.totalorder %s29, 1
      %p103 = por %p101, %p102
      %p104 = scmp.ne.s32.totalorder %s95, %s96
      %p105 = scmp.eq.s32.totalorder %s29, 0
      %p106 = por %p104, %p105
      %p107 = scmp.ne.s32.totalorder %s95, %s96
      %p108 = scmp.eq.s32.totalorder %s30, 1
      %p109 = por %p107, %p108
      %p111 = scmp.ne.s32.totalorder %s96, %s110
      %p112 = scmp.eq.s32.totalorder %s30, 0
      %p113 = por %p111, %p112
      %s115 = sadd.s32 %s114, 1
      %p118 = scmp.eq.s32.totalorder %s24, 1
      %p119 = scmp.ne.s32.totalorder %s114, %s116
      %p120 = scmp.eq.s32.totalorder %s24, 0
      %p121 = por %p119, %p120
      %p122 = scmp.ne.s32.totalorder %s114, %s116
      %p123 = scmp.eq.s32.totalorder %s29, 1
      %p124 = por %p122, %p123
      %p125 = scmp.ne.s32.totalorder %s116, %s117
      %p126 = scmp.eq.s32.totalorder %s29, 0
      %p127 = por %p125, %p126
      %p128 = scmp.ne.s32.totalorder %s116, %s117
      %p129 = scmp.eq.s32.totalorder %s30, 1
      %p130 = por %p128, %p129
      %p132 = scmp.ne.s32.totalorder %s117, %s131
      %p133 = scmp.eq.s32.totalorder %s30, 0
      %p134 = por %p132, %p133
      %s136 = sadd.s32 %s135, 1
      %p139 = scmp.eq.s32.totalorder %s24, 1
      %p140 = scmp.ne.s32.totalorder %s135, %s137
      %p141 = scmp.eq.s32.totalorder %s24, 0
      %p142 = por %p140, %p141
      %p143 = scmp.ne.s32.totalorder %s135, %s137
      %p144 = scmp.eq.s32.totalorder %s29, 1
      %p145 = por %p143, %p144
      %p146 = scmp.ne.s32.totalorder %s137, %s138
      %p147 = scmp.eq.s32.totalorder %s29, 0
      %p148 = por %p146, %p147
      %p149 = scmp.ne.s32.totalorder %s137, %s138
      %p150 = scmp.eq.s32.totalorder %s30, 1
      %p151 = por %p149, %p150
      %p153 = scmp.ne.s32.totalorder %s138, %s152
      %p154 = scmp.eq.s32.totalorder %s30, 0
      %p155 = por %p153, %p154
      %s157 = sadd.s32 %s156, 1
      %p160 = scmp.eq.s32.totalorder %s24, 1
      %p161 = scmp.ne.s32.totalorder %s156, %s158
      %p162 = scmp.eq.s32.totalorder %s24, 0
      %p163 = por %p161, %p162
      %p164 = scmp.ne.s32.totalorder %s156, %s158
      %p165 = scmp.eq.s32.totalorder %s29, 1
      %p166 = por %p164, %p165
      %p167 = scmp.ne.s32.totalorder %s158, %s159
      %p168 = scmp.eq.s32.totalorder %s29, 0
      %p169 = por %p167, %p168
      %p170 = scmp.ne.s32.totalorder %s158, %s159
      %p171 = scmp.eq.s32.totalorder %s30, 1
      %p172 = por %p170, %p171
      %p174 = scmp.ne.s32.totalorder %s159, %s173
      %p175 = scmp.eq.s32.totalorder %s30, 0
      %p176 = por %p174, %p175
      %s178 = sadd.s32 %s177, 1
      %p181 = scmp.eq.s32.totalorder %s24, 1
      %p182 = scmp.ne.s32.totalorder %s177, %s179
      %p183 = scmp.eq.s32.totalorder %s24, 0
      %p184 = por %p182, %p183
      %p185 = scmp.ne.s32.totalorder %s177, %s179
      %p186 = scmp.eq.s32.totalorder %s29, 1
      %p187 = por %p185, %p186
      %p188 = scmp.ne.s32.totalorder %s179, %s180
      %p189 = scmp.eq.s32.totalorder %s29, 0
      %p190 = por %p188, %p189
      %p191 = scmp.ne.s32.totalorder %s179, %s180
      %p192 = scmp.eq.s32.totalorder %s30, 1
      %p193 = por %p191, %p192
      %p195 = scmp.ne.s32.totalorder %s180, %s194
      %p196 = scmp.eq.s32.totalorder %s30, 0
      %p197 = por %p195, %p196
      %s199 = sadd.s32 %s198, 1
      %p202 = scmp.eq.s32.totalorder %s24, 1
      %p203 = scmp.ne.s32.totalorder %s198, %s200
      %p204 = scmp.eq.s32.totalorder %s24, 0
      %p205 = por %p203, %p204
      %p206 = scmp.ne.s32.totalorder %s198, %s200
      %p207 = scmp.eq.s32.totalorder %s29, 1
      %p208 = por %p206, %p207
      %p209 = scmp.ne.s32.totalorder %s200, %s201
      %p210 = scmp.eq.s32.totalorder %s29, 0
      %p211 = por %p209, %p210
      %p212 = scmp.ne.s32.totalorder %s200, %s201
      %p213 = scmp.eq.s32.totalorder %s30, 1
      %p214 = por %p212, %p213
      %p216 = scmp.ne.s32.totalorder %s201, %s215
      %p217 = scmp.eq.s32.totalorder %s30, 0
      %p218 = por %p216, %p217
      %s220 = sadd.s32 %s219, 1
      %p223 = scmp.eq.s32.totalorder %s24, 1
      %p224 = scmp.ne.s32.totalorder %s219, %s221
      %p225 = scmp.eq.s32.totalorder %s24, 0
      %p226 = por %p224, %p225
      %p227 = scmp.ne.s32.totalorder %s219, %s221
      %p228 = scmp.eq.s32.totalorder %s29, 1
      %p229 = por %p227, %p228
      %p230 = scmp.ne.s32.totalorder %s221, %s222
      %p231 = scmp.eq.s32.totalorder %s29, 0
      %p232 = por %p230, %p231
      %p233 = scmp.ne.s32.totalorder %s221, %s222
      %p234 = scmp.eq.s32.totalorder %s30, 1
      %p235 = por %p233, %p234
      %p237 = scmp.ne.s32.totalorder %s222, %s236
      %p238 = scmp.eq.s32.totalorder %s30, 0
      %p239 = por %p237, %p238
      %s240 = ssub.s32 %s31, %s43
      %s241 = ssub.s32 %s32, %s39
      %s242 = sor.u32 %s240, %s241
      %p243 = scmp.eq.s32.totalorder %s242, 0
      %s245 = sadd.s32 %s244, 1
      %s246 = scalar_select %p243, %s244, %s245
      %p249 = pneg %p243
      %p250 = scmp.eq.s32.totalorder %s24, 1
      %p251 = por %p249, %p250
      %p252 = scmp.ne.s32.totalorder %s244, %s247
      %p253 = scmp.eq.s32.totalorder %s24, 0
      %p254 = por %p252, %p253
      %p255 = scmp.ne.s32.totalorder %s244, %s247
      %p256 = scmp.eq.s32.totalorder %s29, 1
      %p257 = por %p255, %p256
      %p258 = scmp.ne.s32.totalorder %s247, %s248
      %p259 = scmp.eq.s32.totalorder %s29, 0
      %p260 = por %p258, %p259
      %p261 = scmp.ne.s32.totalorder %s247, %s248
      %p262 = scmp.eq.s32.totalorder %s30, 1
      %p263 = por %p261, %p262
      %p265 = scmp.ne.s32.totalorder %s248, %s264
      %p266 = scmp.eq.s32.totalorder %s30, 0
      %p267 = por %p265, %p266
      %p268 = scmp.le.s32.totalorder 1, %s24
      %p269 = scmp.lt.s32.totalorder %s24, 3
      %p270 = pnand %p268, %p269
      %p271 = pneg %p270
      // Predicated region
      $region9: #{tpu_custom_call.1} parent=5 // pred_check
        _
      $region10: #{tpu_custom_call.1} parent=5 // pred_check_branch
        %273 = sbr.rel (%p270) target = $region12
      $region11: #{tpu_custom_call.1} parent=5 // pred_region
        %s274 = ssub.s32 %s24, 1
        // Predicated region
        $region13: #{tpu_custom_call.1} parent=11 // pred_check
          %p275 = pneg %p85
        $region14: #{tpu_custom_call.1} parent=11 // pred_check_branch
          %277 = sbr.rel (%p275) target = $region16
        $region15: #{tpu_custom_call.1} parent=11 // pred_region
          _
        $region16: #{tpu_custom_call.1} parent=11 // pred_fallthru
          _
        // Predicated region
        $region17: #{tpu_custom_call.1} parent=11 // pred_check
          %p278 = pneg %p106
        $region18: #{tpu_custom_call.1} parent=11 // pred_check_branch
          %280 = sbr.rel (%p278) target = $region20
        $region19: #{tpu_custom_call.1} parent=11 // pred_region
          _
        $region20: #{tpu_custom_call.1} parent=11 // pred_fallthru
          _
        // Predicated region
        $region21: #{tpu_custom_call.1} parent=11 // pred_check
          %p281 = pneg %p127
        $region22: #{tpu_custom_call.1} parent=11 // pred_check_branch
          %283 = sbr.rel (%p281) target = $region24
        $region23: #{tpu_custom_call.1} parent=11 // pred_region
          _
        $region24: #{tpu_custom_call.1} parent=11 // pred_fallthru
          _
        // Predicated region
        $region25: #{tpu_custom_call.1} parent=11 // pred_check
          %p284 = pneg %p148
        $region26: #{tpu_custom_call.1} parent=11 // pred_check_branch
          %286 = sbr.rel (%p284) target = $region28
        $region27: #{tpu_custom_call.1} parent=11 // pred_region
          _
        $region28: #{tpu_custom_call.1} parent=11 // pred_fallthru
          _
        // Predicated region
        $region29: #{tpu_custom_call.1} parent=11 // pred_check
          %p287 = pneg %p169
        $region30: #{tpu_custom_call.1} parent=11 // pred_check_branch
          %289 = sbr.rel (%p287) target = $region32
        $region31: #{tpu_custom_call.1} parent=11 // pred_region
          %s291 = ssub.s32 16, 16
          %292 = vsyncadd [#allocation6], %s291
          %s294 = sshll.u32 %s5, 4
          %s295 = int_to_ptr.vmem [resolvable:$true] %s294
          %297 = dma.vmem_to_smem %s295, 16, [#allocation7], [#allocation6]
        $region32: #{tpu_custom_call.1} parent=11 // pred_fallthru
          _
        // Predicated region
        $region33: #{tpu_custom_call.1} parent=11 // pred_check
          %p298 = pneg %p190
        $region34: #{tpu_custom_call.1} parent=11 // pred_check_branch
          %300 = sbr.rel (%p298) target = $region36
        $region35: #{tpu_custom_call.1} parent=11 // pred_region
          %s302 = ssub.s32 16, 16
          %303 = vsyncadd [#allocation9], %s302
          %s305 = sshll.u32 %s6, 4
          %s306 = int_to_ptr.vmem [resolvable:$true] %s305
          %308 = dma.vmem_to_smem %s306, 16, [#allocation8], [#allocation9]
        $region36: #{tpu_custom_call.1} parent=11 // pred_fallthru
          _
        // Predicated region
        $region37: #{tpu_custom_call.1} parent=11 // pred_check
          %p309 = pneg %p211
        $region38: #{tpu_custom_call.1} parent=11 // pred_check_branch
          %311 = sbr.rel (%p309) target = $region40
        $region39: #{tpu_custom_call.1} parent=11 // pred_region
          %s313 = ssub.s32 16, 16
          %314 = vsyncadd [#allocation9], %s313
          %s316 = sshll.u32 %s7, 4
          %s317 = int_to_ptr.vmem [resolvable:$true] %s316
          %319 = dma.vmem_to_smem %s317, 16, [#allocation10], [#allocation9]
        $region40: #{tpu_custom_call.1} parent=11 // pred_fallthru
          _
        // Predicated region
        $region41: #{tpu_custom_call.1} parent=11 // pred_check
          %p320 = pneg %p232
        $region42: #{tpu_custom_call.1} parent=11 // pred_check_branch
          %322 = sbr.rel (%p320) target = $region44
        $region43: #{tpu_custom_call.1} parent=11 // pred_region
          _
        $region44: #{tpu_custom_call.1} parent=11 // pred_fallthru
          _
      $region12: #{tpu_custom_call.1} parent=5 // pred_fallthru
        _
      %p323 = scmp.lt.s32.totalorder %s24, 2
      // Predicated region
      $region45: #{tpu_custom_call.1} parent=5 // pred_check
        %p324 = pneg %p323
      $region46: #{tpu_custom_call.1} parent=5 // pred_check_branch
        %326 = sbr.rel (%p324) target = $region48
      $region47: #{tpu_custom_call.1} parent=5 // pred_region
        // Predicated region
        $region49: #{tpu_custom_call.1} parent=47 // pred_check
          %p327 = pneg %p58
        $region50: #{tpu_custom_call.1} parent=47 // pred_check_branch
          %329 = sbr.rel (%p327) target = $region52
        $region51: #{tpu_custom_call.1} parent=47 // pred_region
          %s330 = sand.u32 %s48, 1
          %s331 = scalar_lea.sflag [#allocation4], %s330
          %s332 = sand.u32 %s48, 1
          %s333 = smul.addr %s332, 8
          %s334 = scalar_lea.vmem [#allocation3], %s333
          %s335 = smul.u32 2, %s32
          %s337 = ssub.s32 128, 128
          %338 = vsyncadd %s331, %s337
          %s339 = smul.addr %s31, 2
          %s340 = sadd.s32 %s335, %s339
          %s341 = smul.addr %s340, 64
          %s342 = scalar_lea.hbm %s0, %s341
          %s344 = sshll.u32 %s334, 4
          %s345 = int_to_ptr.vmem [resolvable:$true] %s344
          %347 = dma.hbm_to_vmem [thread:$0]  %s342, 128, %s345, %s331
        $region52: #{tpu_custom_call.1} parent=47 // pred_fallthru
          _
      $region48: #{tpu_custom_call.1} parent=5 // pred_fallthru
        _
      %p348 = scmp.le.s32.totalorder 1, %s24
      %p349 = scmp.lt.s32.totalorder %s24, 3
      %p350 = pnand %p348, %p349
      %p351 = pneg %p350
      // Predicated region
      $region53: #{tpu_custom_call.1} parent=5 // pred_check
        _
      $region54: #{tpu_custom_call.1} parent=5 // pred_check_branch
        %353 = sbr.rel (%p350) target = $region56
      $region55: #{tpu_custom_call.1} parent=5 // pred_region
        %s354 = ssub.s32 %s24, 1
        %s355 = sand.u32 %s51, 1
        %s356 = scalar_lea.sflag [#allocation4], %s355
        %s357 = sand.u32 %s51, 1
        %s358 = smul.addr %s357, 8
        %s359 = scalar_lea.vmem [#allocation3], %s358
        // Predicated region
        $region57: #{tpu_custom_call.1} parent=55 // pred_check
          %p360 = pneg %p64
        $region58: #{tpu_custom_call.1} parent=55 // pred_check_branch
          %362 = sbr.rel (%p360) target = $region60
        $region59: #{tpu_custom_call.1} parent=55 // pred_region
          %363 = dma.done %s356, 128
        $region60: #{tpu_custom_call.1} parent=55 // pred_fallthru
          _
        // Predicated region
        $region61: #{tpu_custom_call.1} parent=55 // pred_check
          %p364 = pneg %p169
        $region62: #{tpu_custom_call.1} parent=55 // pred_check_branch
          %366 = sbr.rel (%p364) target = $region64
        $region63: #{tpu_custom_call.1} parent=55 // pred_region
          %367 = dma.done [#allocation6], 16
        $region64: #{tpu_custom_call.1} parent=55 // pred_fallthru
          _
        // Predicated region
        $region65: #{tpu_custom_call.1} parent=55 // pred_check
          %p368 = pneg %p190
        $region66: #{tpu_custom_call.1} parent=55 // pred_check_branch
          %370 = sbr.rel (%p368) target = $region68
        $region67: #{tpu_custom_call.1} parent=55 // pred_region
          %371 = dma.done [#allocation9], 16
        $region68: #{tpu_custom_call.1} parent=55 // pred_fallthru
          _
        // Predicated region
        $region69: #{tpu_custom_call.1} parent=55 // pred_check
          %p372 = pneg %p211
        $region70: #{tpu_custom_call.1} parent=55 // pred_check_branch
          %374 = sbr.rel (%p372) target = $region72
        $region71: #{tpu_custom_call.1} parent=55 // pred_region
          %375 = dma.done [#allocation9], 16
        $region72: #{tpu_custom_call.1} parent=55 // pred_fallthru
          _
        %376 = sfence
        %s377 = sand.u32 %s51, 1
        %s378 = scalar_lea.sflag [#allocation4], %s377
        %s379 = sand.u32 %s51, 1
        %s380 = smul.addr %s379, 8
        %s381 = scalar_lea.vmem [#allocation3], %s380
        %p382 = pneg %p64
        %p383 = pneg %p61
        %p384 = pneg %p85
        %p385 = pneg %p82
        %p386 = pneg %p106
        %p387 = pneg %p103
        %p388 = pneg %p127
        %p389 = pneg %p124
        %p390 = pneg %p148
        %p391 = pneg %p145
        %p392 = pneg %p169
        %p393 = pneg %p166
        %p394 = pneg %p190
        %p395 = pneg %p187
        %p396 = pneg %p211
        %p397 = pneg %p208
        %p398 = pneg %p232
        %p399 = pneg %p229
        %p400 = pneg %p260
        %p401 = pneg %p257
        %s402 = sand.u32 %s247, 1
        %s403 = scalar_lea.sflag [#allocation5], %s402
        %s404 = sand.u32 %s247, 1
        %s405 = smul.addr %s404, 8
        %s406 = scalar_lea.vmem [#allocation11], %s405
        %s407 = smul.u32 2, %s34
        %s408 = smul.u32 2, %s34
        %v409 = vld [vmem:[%s359] sm:$0xff]
        %v410 = vld [vmem:[%s1] sm:$0xf]
        %v411 = vld [vmem:[%s2] sm:$0xf]
        %413 = vset.pattern.permute.xlu0 0
        %414 = vperm.xlu0 %413, %v411
        %v415 = vpop.permute.xlu0 %414
        %v418 = vcombine.high %v409, %v409
        %vm419 = vcmask 31744
        %v421 = vsel %vm419, %v410, 0
        %vm423 = vcmask 1043456
        %v424 = vsel %vm423, %v409, 0
        %v426 = vsel %vm423, %v418, 0
        %428 = vmatprep.subr.mxu0 %v426
        %429 = vmatpush1.msra.mxu0 %v424
        %430 = vmatprep.subr.mxu0 0.0
        %431 = vmatpush1.msra.mxu0 0.0
        %432 = vmatprep.subr.mxu0 0.0
        %433 = vmatpush1.msra.mxu0 0.0
        %434 = vmatprep.subr.mxu0 0.0
        %435 = vmatpush1.msra.mxu0 0.0
        %436 = vmatprep.subr.mxu0 0.0
        %437 = vmatpush1.msra.mxu0 0.0
        %438 = vmatprep.subr.mxu0 0.0
        %439 = vmatpush1.msra.mxu0 0.0
        %440 = vmatprep.subr.mxu0 0.0
        %441 = vmatpush1.msra.mxu0 0.0
        %442 = vmatprep.subr.mxu0 0.0
        %443 = vmatpush1.msra.mxu0 0.0
        %444 = vmatprep.subr.mxu0 0.0
        %445 = vmatpush1.msra.mxu0 0.0
        %446 = vmatprep.subr.mxu0 0.0
        %447 = vmatpush1.msra.mxu0 0.0
        %448 = vmatprep.subr.mxu0 0.0
        %449 = vmatpush1.msra.mxu0 0.0
        %450 = vmatprep.subr.mxu0 0.0
        %451 = vmatpush1.msra.mxu0 0.0
        %452 = vmatprep.subr.mxu0 0.0
        %453 = vmatpush1.msra.mxu0 0.0
        %454 = vmatprep.subr.mxu0 0.0
        %455 = vmatpush1.msra.mxu0 0.0
        %456 = vmatprep.subr.mxu0 0.0
        %457 = vmatpush1.msra.mxu0 0.0
        %458 = vmatprep.subr.mxu0 0.0
        %459 = vmatpush1.msra.mxu0 0.0
        %460 = vmatprep.subr.mxu0 0.0
        %461 = vmatpush1.msra.mxu0 0.0
        %462 = vmatprep.subr.mxu0 0.0
        %463 = vmatpush1.msra.mxu0 0.0
        %464 = vmatprep.subr.mxu0 0.0
        %465 = vmatpush1.msra.mxu0 0.0
        %466 = vmatprep.subr.mxu0 0.0
        %467 = vmatpush1.msra.mxu0 0.0
        %468 = vmatprep.subr.mxu0 0.0
        %469 = vmatpush1.msra.mxu0 0.0
        %470 = vmatprep.subr.mxu0 0.0
        %471 = vmatpush1.msra.mxu0 0.0
        %472 = vmatprep.subr.mxu0 0.0
        %473 = vmatpush1.msra.mxu0 0.0
        %474 = vmatprep.subr.mxu0 0.0
        %475 = vmatpush1.msra.mxu0 0.0
        %476 = vmatprep.subr.mxu0 0.0
        %477 = vmatpush1.msra.mxu0 0.0
        %478 = vmatprep.subr.mxu0 0.0
        %479 = vmatpush1.msra.mxu0 0.0
        %480 = vmatprep.subr.mxu0 0.0
        %481 = vmatpush1.msra.mxu0 0.0
        %482 = vmatprep.subr.mxu0 0.0
        %483 = vmatpush1.msra.mxu0 0.0
        %484 = vmatprep.subr.mxu0 0.0
        %485 = vmatpush1.msra.mxu0 0.0
        %486 = vmatprep.subr.mxu0 0.0
        %487 = vmatpush1.msra.mxu0 0.0
        %488 = vmatprep.subr.mxu0 0.0
        %489 = vmatpush1.msra.mxu0 0.0
        %490 = vmatprep.subr.mxu0 0.0
        %491 = vmatpush1.msra.mxu0 0.0
        %492 = vmatprep.mubr.f32.mxu0 0.0
        %493 = vmatmul.mubr.f32.gmra.mrb[0].mxu0 %v421
        %v494 = vpop.f32.mrb[0].mxu0
        %v495 = vadd.f32 %v415, %v494
        %v496 = vpop.f32.mrb[0].mxu0
        %v497 = vadd.f32 %v415, %v496
        %498 = vdwg.mxu0
        %v499 = vmax.f32 %v495, 0.0
        %v500 = vmax.f32 %v497, 0.0
        %v501 = vsel %vm423, %v499, 0.0
        %v502 = vrot.slane %v501, 4
        %v503 = vadd.f32 %v501, %v502
        %v504 = vrot.slane %v503, 2
        %v505 = vadd.f32 %v503, %v504
        %v506 = vrot.slane %v505, 1
        %v507 = vadd.f32 %v505, %v506
        %v508 = vsel %vm423, %v500, 0.0
        %v509 = vrot.slane %v508, 4
        %v510 = vadd.f32 %v508, %v509
        %v511 = vrot.slane %v510, 2
        %v512 = vadd.f32 %v510, %v511
        %v513 = vrot.slane %v512, 1
        %v514 = vadd.f32 %v512, %v513
        %v515 = vrcp.pop 4.0
        %v516 = vmul.f32 %v507, %v515
        %v517 = vmul.f32 %v514, %v515
        %v518 = vld [vmem:[%s3] sm:$0xf]
        %v519 = vld [vmem:[%s4] sm:$0xf]
        %521 = vset.pattern.permute.xlu0 0
        %522 = vperm.xlu0 %521, %v519
        %v523 = vpop.permute.xlu0 %522
        %v526 = vsel %vm419, %v518, 0
        %528 = vmatprep.subr.mxu0 %v426
        %529 = vmatpush1.msra.mxu0 %v424
        %530 = vmatprep.subr.mxu0 0.0
        %531 = vmatpush1.msra.mxu0 0.0
        %532 = vmatprep.subr.mxu0 0.0
        %533 = vmatpush1.msra.mxu0 0.0
        %534 = vmatprep.subr.mxu0 0.0
        %535 = vmatpush1.msra.mxu0 0.0
        %536 = vmatprep.subr.mxu0 0.0
        %537 = vmatpush1.msra.mxu0 0.0
        %538 = vmatprep.subr.mxu0 0.0
        %539 = vmatpush1.msra.mxu0 0.0
        %540 = vmatprep.subr.mxu0 0.0
        %541 = vmatpush1.msra.mxu0 0.0
        %542 = vmatprep.subr.mxu0 0.0
        %543 = vmatpush1.msra.mxu0 0.0
        %544 = vmatprep.subr.mxu0 0.0
        %545 = vmatpush1.msra.mxu0 0.0
        %546 = vmatprep.subr.mxu0 0.0
        %547 = vmatpush1.msra.mxu0 0.0
        %548 = vmatprep.subr.mxu0 0.0
        %549 = vmatpush1.msra.mxu0 0.0
        %550 = vmatprep.subr.mxu0 0.0
        %551 = vmatpush1.msra.mxu0 0.0
        %552 = vmatprep.subr.mxu0 0.0
        %553 = vmatpush1.msra.mxu0 0.0
        %554 = vmatprep.subr.mxu0 0.0
        %555 = vmatpush1.msra.mxu0 0.0
        %556 = vmatprep.subr.mxu0 0.0
        %557 = vmatpush1.msra.mxu0 0.0
        %558 = vmatprep.subr.mxu0 0.0
        %559 = vmatpush1.msra.mxu0 0.0
        %560 = vmatprep.subr.mxu0 0.0
        %561 = vmatpush1.msra.mxu0 0.0
        %562 = vmatprep.subr.mxu0 0.0
        %563 = vmatpush1.msra.mxu0 0.0
        %564 = vmatprep.subr.mxu0 0.0
        %565 = vmatpush1.msra.mxu0 0.0
        %566 = vmatprep.subr.mxu0 0.0
        %567 = vmatpush1.msra.mxu0 0.0
        %568 = vmatprep.subr.mxu0 0.0
        %569 = vmatpush1.msra.mxu0 0.0
        %570 = vmatprep.subr.mxu0 0.0
        %571 = vmatpush1.msra.mxu0 0.0
        %572 = vmatprep.subr.mxu0 0.0
        %573 = vmatpush1.msra.mxu0 0.0
        %574 = vmatprep.subr.mxu0 0.0
        %575 = vmatpush1.msra.mxu0 0.0
        %576 = vmatprep.subr.mxu0 0.0
        %577 = vmatpush1.msra.mxu0 0.0
        %578 = vmatprep.subr.mxu0 0.0
        %579 = vmatpush1.msra.mxu0 0.0
        %580 = vmatprep.subr.mxu0 0.0
        %581 = vmatpush1.msra.mxu0 0.0
        %582 = vmatprep.subr.mxu0 0.0
        %583 = vmatpush1.msra.mxu0 0.0
        %584 = vmatprep.subr.mxu0 0.0
        %585 = vmatpush1.msra.mxu0 0.0
        %586 = vmatprep.subr.mxu0 0.0
        %587 = vmatpush1.msra.mxu0 0.0
        %588 = vmatprep.subr.mxu0 0.0
        %589 = vmatpush1.msra.mxu0 0.0
        %590 = vmatprep.subr.mxu0 0.0
        %591 = vmatpush1.msra.mxu0 0.0
        %592 = vmatprep.mubr.f32.mxu0 0.0
        %593 = vmatmul.mubr.f32.gmra.mrb[0].mxu0 %v526
        %v594 = vpop.f32.mrb[0].mxu0
        %v595 = vadd.f32 %v523, %v594
        %v596 = vpop.f32.mrb[0].mxu0
        %v597 = vadd.f32 %v523, %v596
        %598 = vdwg.mxu0
        %v599 = vmax.f32 %v595, 0.0
        %v600 = vmax.f32 %v597, 0.0
        %v601 = vsel %vm423, %v599, -inf
        %v602 = vrot.slane %v601, 4
        %v603 = vmax.f32 %v601, %v602
        %v604 = vrot.slane %v603, 2
        %v605 = vmax.f32 %v603, %v604
        %v606 = vrot.slane %v605, 1
        %v607 = vmax.f32 %v605, %v606
        %v608 = vsel %vm423, %v600, -inf
        %v609 = vrot.slane %v608, 4
        %v610 = vmax.f32 %v608, %v609
        %v611 = vrot.slane %v610, 2
        %v612 = vmax.f32 %v610, %v611
        %v613 = vrot.slane %v612, 1
        %v614 = vmax.f32 %v612, %v613
        %v615 = vadd.f32 %v516, %v607
        %v616 = vadd.f32 %v517, %v614
        %s617 = sld [smem:[#allocation2]]
        %v618 = vstv %s617
        %v619 = vadd.f32 %v618, 0.0
        %s620 = sld [smem:[#allocation10]]
        %s621 = sld [smem:[#allocation7]]
        %v622 = vstv %s621
        %v623 = vmul.f32 %v622, %v615
        %v624 = vmul.f32 %v622, %v616
        %s625 = sld [smem:[#allocation8]]
        %v626 = vstv %s625
        %v627 = vadd.f32 %v623, %v626
        %v628 = vadd.f32 %v624, %v626
        %v629 = vmax.f32 %v627, 0.0
        %v630 = vmax.f32 %v628, 0.0
        %v631 = vstv %s620
        %v632 = vmul.f32 %v631, %v629
        %v633 = vmul.f32 %v631, %v630
        %v634 = vadd.f32 %v619, %v632
        %v635 = vadd.f32 %v619, %v633
        %s636 = sld [smem:[#allocation10 + $0x1]]
        %s637 = sld [smem:[#allocation7 + $0x1]]
        %v638 = vstv %s637
        %v639 = vmul.f32 %v638, %v615
        %v640 = vmul.f32 %v638, %v616
        %s641 = sld [smem:[#allocation8 + $0x1]]
        %v642 = vstv %s641
        %v643 = vadd.f32 %v639, %v642
        %v644 = vadd.f32 %v640, %v642
        %v645 = vmax.f32 %v643, 0.0
        %v646 = vmax.f32 %v644, 0.0
        %v647 = vstv %s636
        %v648 = vmul.f32 %v647, %v645
        %v649 = vmul.f32 %v647, %v646
        %v650 = vadd.f32 %v634, %v648
        %v651 = vadd.f32 %v635, %v649
        %s652 = sld [smem:[#allocation10 + $0x2]]
        %s653 = sld [smem:[#allocation7 + $0x2]]
        %v654 = vstv %s653
        %v655 = vmul.f32 %v654, %v615
        %v656 = vmul.f32 %v654, %v616
        %s657 = sld [smem:[#allocation8 + $0x2]]
        %v658 = vstv %s657
        %v659 = vadd.f32 %v655, %v658
        %v660 = vadd.f32 %v656, %v658
        %v661 = vmax.f32 %v659, 0.0
        %v662 = vmax.f32 %v660, 0.0
        %v663 = vstv %s652
        %v664 = vmul.f32 %v663, %v661
        %v665 = vmul.f32 %v663, %v662
        %v666 = vadd.f32 %v650, %v664
        %v667 = vadd.f32 %v651, %v665
        %s668 = sld [smem:[#allocation10 + $0x3]]
        %s669 = sld [smem:[#allocation7 + $0x3]]
        %v670 = vstv %s669
        %v671 = vmul.f32 %v670, %v615
        %v672 = vmul.f32 %v670, %v616
        %s673 = sld [smem:[#allocation8 + $0x3]]
        %v674 = vstv %s673
        %v675 = vadd.f32 %v671, %v674
        %v676 = vadd.f32 %v672, %v674
        %v677 = vmax.f32 %v675, 0.0
        %v678 = vmax.f32 %v676, 0.0
        %v679 = vstv %s668
        %v680 = vmul.f32 %v679, %v677
        %v681 = vmul.f32 %v679, %v678
        %v682 = vadd.f32 %v666, %v680
        %v683 = vadd.f32 %v667, %v681
        %v686 = vcombine.low %v682, %v683
        %v688 = vmul.f32 %v409, %v686
        %689 = vst [vmem:[%s406] sm:$0xff] %v688
        %s690 = sand.u32 %s247, 1
        %s691 = scalar_lea.sflag [#allocation5], %s690
        %s692 = sand.u32 %s247, 1
        %s693 = smul.addr %s692, 8
        %s694 = scalar_lea.vmem [#allocation11], %s693
        // Predicated region
        $region73: #{tpu_custom_call.1} parent=55 // pred_check
          %p695 = pneg %p257
        $region74: #{tpu_custom_call.1} parent=55 // pred_check_branch
          %697 = sbr.rel (%p695) target = $region76
        $region75: #{tpu_custom_call.1} parent=55 // pred_region
          %s698 = smul.u32 2, %s34
          %s700 = ssub.s32 128, 128
          %701 = vsyncadd %s691, %s700
          %s702 = smul.addr %s33, 2
          %s703 = sadd.s32 %s698, %s702
          %s704 = smul.addr %s703, 64
          %s705 = scalar_lea.hbm %s9, %s704
          %s707 = sshll.u32 %s694, 4
          %s708 = int_to_ptr.vmem [resolvable:$true] %s707
          %710 = dma.vmem_to_hbm [thread:$0]  %s708, 128, %s705, %s691
        $region76: #{tpu_custom_call.1} parent=55 // pred_fallthru
          _
      $region56: #{tpu_custom_call.1} parent=5 // pred_fallthru
        _
      %p711 = scmp.le.s32.totalorder 2, %s24
      // Predicated region
      $region77: #{tpu_custom_call.1} parent=5 // pred_check
        %p712 = pneg %p711
      $region78: #{tpu_custom_call.1} parent=5 // pred_check_branch
        %714 = sbr.rel (%p712) target = $region80
      $region79: #{tpu_custom_call.1} parent=5 // pred_region
        %s715 = ssub.s32 %s24, 2
        // Predicated region
        $region81: #{tpu_custom_call.1} parent=79 // pred_check
          %p716 = pneg %p263
        $region82: #{tpu_custom_call.1} parent=79 // pred_check_branch
          %718 = sbr.rel (%p716) target = $region84
        $region83: #{tpu_custom_call.1} parent=79 // pred_region
          %s719 = sand.u32 %s248, 1
          %s720 = scalar_lea.sflag [#allocation5], %s719
          %s721 = sand.u32 %s248, 1
          %s722 = smul.addr %s721, 8
          %s723 = scalar_lea.vmem [#allocation11], %s722
          %724 = dma.done %s720, 128
        $region84: #{tpu_custom_call.1} parent=79 // pred_fallthru
          _
      $region80: #{tpu_custom_call.1} parent=5 // pred_fallthru
        _
    $region6: #{tpu_custom_call.1} parent=1 // loop_footer
      %s28 = sadd.s32 1, %s24
    $region7: #{tpu_custom_call.1} parent=1 // loop_footer_branch
      %23 = sbr.rel target = $region3
    $region8: #{tpu_custom_call.1} parent=1 // loop_exit
      _
    %725 = vsyncpa [#allocation4], 1
    %s726 = scalar_lea.sflag [#allocation4], 1
    %727 = vsyncpa %s726, 1
    %728 = vsyncpa [#allocation5], 1
    %s729 = scalar_lea.sflag [#allocation5], 1
    %730 = vsyncpa %s729, 1
    %731 = vsyncpa [#allocation6], 1
    %s732 = scalar_lea.sflag [#allocation6], 1
    %733 = vsyncpa %s732, 1
    %734 = vsyncpa [#allocation9], 1

</llo_original>
